<compile_context>
chip_gen: v6e
topology: v6e:2x2x1
jax: 0.10.0
libtpu: 0.0.40
codegen_flags: <defaults>
</compile_context>

<pallas_src>
import functools
import math

import jax
import jax.numpy as jnp
from jax.experimental import pallas as pl
from jax.experimental.pallas import tpu as pltpu


TILE_N_TARGET = 8192  # points per grid step (feature-major: ~0.9 MiB input/step)


def _round_up(x, m):
    return ((x + m - 1) // m) * m


def _offset_mlp_kernel(x_ref, w1t_ref, b1t_ref, w2t_ref, b2t_ref, w3t_ref,
                       b3t_ref, out_ref, norm_ref, *,
                       offset_scale, n_valid, tile_n):
    i = pl.program_id(0)

    x = x_ref[...]                                             # (Din, tile_n) f32

    # Entire MLP is feature-major: every intermediate is (features, tile_n),
    # so vregs are lane-dense and no transpose/relayout is ever materialized.
    h = jnp.dot(w1t_ref[...], x, preferred_element_type=jnp.float32) + b1t_ref[...]
    h = jnp.maximum(h, 0.0)                                    # (H, tile_n)

    h = jnp.dot(w2t_ref[...], h, preferred_element_type=jnp.float32) + b2t_ref[...]
    h = jnp.maximum(h, 0.0)                                    # (H, tile_n)

    o = jnp.dot(w3t_ref[...], h, preferred_element_type=jnp.float32) + b3t_ref[...]
    o = jnp.tanh(o) * offset_scale                             # (Dout, tile_n)

    out_ref[...] = o.astype(out_ref.dtype)                     # lane-dense store

    # Per-point L2 norm (reduce over the tiny Dout sublane axis). Padded
    # columns are zeroed so the wrapper's plain sum / N is exact.
    nrm = jnp.sqrt(jnp.sum(o * o, axis=0, keepdims=True))      # (1, tile_n)
    col = jax.lax.broadcasted_iota(jnp.int32, (1, tile_n), 1) + i * tile_n
    norm_ref[...] = jnp.where(col < n_valid, nrm, 0.0)


def _run_offset_net(pts, dirs, params, offset_scale, out_dtype,
                    tile_n_target=TILE_N_TARGET):
    """pts: (N, d_pts) f32, dirs: (N, d_dirs) f32.
    Returns (offsets^T as (Dout, N_pad) in out_dtype, sum of per-point L2 norms)."""
    w1, b1, w2, b2, w3, b3 = params
    n, d_pts = pts.shape
    _, d_dirs = dirs.shape
    din = d_pts + d_dirs
    H = w1.shape[1]
    Dout = w3.shape[1]

    tile_n = min(tile_n_target, _round_up(n, 128))
    n_pad = _round_up(n, tile_n)
    num_tiles = n_pad // tile_n

    # Single fused copy: concat(pts, dirs) + transpose to feature-major + pad.
    x_t = jnp.concatenate([pts.T, dirs.T], axis=0)             # (Din, N)
    if n_pad != n:
        x_t = jnp.pad(x_t, ((0, 0), (0, n_pad - n)))

    # Tiny trace-time weight reshuffles into feature-major orientation.
    w1t, w2t, w3t = w1.T, w2.T, w3.T                           # (H,Din),(H,H),(Dout,H)
    b1t, b2t, b3t = b1.reshape(H, 1), b2.reshape(H, 1), b3.reshape(Dout, 1)

    kernel = functools.partial(_offset_mlp_kernel,
                               offset_scale=float(offset_scale),
                               n_valid=n, tile_n=tile_n)

    grid_spec = pltpu.PrefetchScalarGridSpec(
        num_scalar_prefetch=0,
        grid=(num_tiles,),
        in_specs=[
            pl.BlockSpec((din, tile_n), lambda i: (0, i)),     # x^T tile (lane-dense)
            pl.BlockSpec((H, din), lambda i: (0, 0)),          # w1^T
            pl.BlockSpec((H, 1), lambda i: (0, 0)),            # b1^T
            pl.BlockSpec((H, H), lambda i: (0, 0)),            # w2^T
            pl.BlockSpec((H, 1), lambda i: (0, 0)),            # b2^T
            pl.BlockSpec((Dout, H), lambda i: (0, 0)),         # w3^T
            pl.BlockSpec((Dout, 1), lambda i: (0, 0)),         # b3^T
        ],
        out_specs=[
            pl.BlockSpec((Dout, tile_n), lambda i: (0, i)),    # offsets^T (lane-dense)
            pl.BlockSpec((1, tile_n), lambda i: (0, i)),       # masked per-point norms
        ],
    )

    out_bytes = jnp.dtype(out_dtype).itemsize
    flops = 2 * n_pad * (din * H + H * H + H * Dout)
    bytes_accessed = (4 * n_pad * din + out_bytes * n_pad * Dout + 4 * n_pad
                      + 4 * (din * H + H + H * H + H + Dout * H + Dout))
    cost = pl.CostEstimate(flops=flops,
                           transcendentals=n_pad * (Dout + 1),
                           bytes_accessed=bytes_accessed)

    out_t, norms = pl.pallas_call(
        kernel,
        out_shape=(
            jax.ShapeDtypeStruct((Dout, n_pad), out_dtype),
            jax.ShapeDtypeStruct((1, n_pad), jnp.float32),
        ),
        grid_spec=grid_spec,
        compiler_params=pltpu.CompilerParams(
            dimension_semantics=("parallel",),      # no carried state -> megacore OK
            vmem_limit_bytes=32 * 1024 * 1024),
        cost_estimate=cost,
    )(x_t, w1t, b1t, w2t, b2t, w3t, b3t)

    return out_t, jnp.sum(norms)


class OffsetModule:
    """JAX/Pallas port of OffsetModule (forward path)."""

    def __init__(self, params, offset_scale, offset_delay):
        self.params = params
        self.offset_scale = offset_scale
        self.offset_delay = offset_delay
        self.mean_offset = 0.0

    def forward(self, input_pts, input_dirs, curr_epoch):
        if curr_epoch < self.offset_delay:
            # PyTorch module leaves self.mean_offset untouched in this branch.
            return jnp.zeros(input_pts.shape[:-1] + (3,), dtype=input_pts.dtype)

        lead = input_pts.shape[:-1]
        n = math.prod(lead) if lead else 1
        pts = input_pts.reshape(n, -1).astype(jnp.float32)
        dirs = input_dirs.reshape(n, -1).astype(jnp.float32)

        out_t, norm_sum = _run_offset_net(pts, dirs, self.params,
                                          self.offset_scale,
                                          out_dtype=input_pts.dtype)
        self.mean_offset = norm_sum / n   # == torch.norm(offset, dim=-1).mean()
        offsets = out_t[:, :n].T          # (n, 3); drop padded columns
        return offsets.reshape(lead + (3,))

    # TODO(synk): batched_forward (abs-mean variant) not implemented; forward
    # covers the module's primary path.


def _init_params(key, d_pts, d_dirs, hidden, d_out=3):
    """Deterministic synthetic offset_net parameters."""
    din = d_pts + d_dirs
    k1, k2, k3, k4, k5, k6 = jax.random.split(key, 6)
    w1 = jax.random.normal(k1, (din, hidden), jnp.float32) * (1.0 / jnp.sqrt(din))
    b1 = jax.random.normal(k2, (1, hidden), jnp.float32) * 0.01
    w2 = jax.random.normal(k3, (hidden, hidden), jnp.float32) * (1.0 / jnp.sqrt(hidden))
    b2 = jax.random.normal(k4, (1, hidden), jnp.float32) * 0.01
    w3 = jax.random.normal(k5, (hidden, d_out), jnp.float32) * (1.0 / jnp.sqrt(hidden))
    b3 = jax.random.normal(k6, (1, d_out), jnp.float32) * 0.01
    return (w1, b1, w2, b2, w3, b3)


def _reference(x, params, offset_scale):
    w1, b1, w2, b2, w3, b3 = params
    h = jnp.maximum(x @ w1 + b1, 0.0)
    h = jnp.maximum(h @ w2 + b2, 0.0)
    o = jnp.tanh(h @ w3 + b3) * offset_scale
    return o, jnp.mean(jnp.linalg.norm(o, axis=-1))


if __name__ == "__main__":
    key = jax.random.PRNGKey(0)
    kp, kd, kw, kp2, kd2 = jax.random.split(key, 5)

    B, S = 2, 128
    D_PTS, D_DIRS, HIDDEN = 16, 12, 32

    input_pts = jax.random.normal(kp, (B, S, D_PTS), jnp.float32)
    input_dirs = jax.random.normal(kd, (B, S, D_DIRS), jnp.float32)
    params = _init_params(kw, D_PTS, D_DIRS, HIDDEN)

    offset_scale = 0.05
    offset_delay = 10
    mod = OffsetModule(params, offset_scale, offset_delay)

    # Branch 1: before delay -> zeros of shape (..., 3)
    off0 = jax.block_until_ready(mod.forward(input_pts, input_dirs, curr_epoch=0))
    assert off0.shape == (B, S, 3) and float(jnp.abs(off0).max()) == 0.0

    # Branch 2: after delay -> Pallas MLP + tanh*scale + norm-mean
    off1 = jax.block_until_ready(mod.forward(input_pts, input_dirs, curr_epoch=20))
    x_flat = jnp.concatenate(
        [input_pts.reshape(-1, D_PTS), input_dirs.reshape(-1, D_DIRS)], axis=-1)
    ref_off, ref_mean = _reference(x_flat, params, offset_scale)
    assert jnp.allclose(off1.reshape(-1, 3), ref_off, atol=1e-5, rtol=1e-5)
    assert jnp.allclose(mod.mean_offset, ref_mean, atol=1e-5, rtol=1e-5)

    # Row count that is not a multiple of the tile (exercises padding + masking)
    B2, S2 = 3, 100   # N = 300 -> padded to 384
    pts2 = jax.random.normal(kp2, (B2, S2, D_PTS), jnp.float32)
    dirs2 = jax.random.normal(kd2, (B2, S2, D_DIRS), jnp.float32)
    off2 = jax.block_until_ready(mod.forward(pts2, dirs2, curr_epoch=20))
    x2 = jnp.concatenate(
        [pts2.reshape(-1, D_PTS), dirs2.reshape(-1, D_DIRS)], axis=-1)
    ref_off2, ref_mean2 = _reference(x2, params, offset_scale)
    assert jnp.allclose(off2.reshape(-1, 3), ref_off2, atol=1e-5, rtol=1e-5)
    assert jnp.allclose(mod.mean_offset, ref_mean2, atol=1e-5, rtol=1e-5)

    print("KERNEL_OK")
</pallas_src>

<mosaic_0001>
module attributes {stable_mosaic.version = 11 : i64} {
  func.func @_offset_mlp_kernel(%arg0: i32, %arg1: memref<28x256xf32, #tpu.memory_space<vmem>>, %arg2: memref<32x28xf32, #tpu.memory_space<vmem>>, %arg3: memref<32x1xf32, #tpu.memory_space<vmem>>, %arg4: memref<32x32xf32, #tpu.memory_space<vmem>>, %arg5: memref<32x1xf32, #tpu.memory_space<vmem>>, %arg6: memref<3x32xf32, #tpu.memory_space<vmem>>, %arg7: memref<3x1xf32, #tpu.memory_space<vmem>>, %arg8: memref<3x256xf32, #tpu.memory_space<vmem>>, %arg9: memref<1x256xf32, #tpu.memory_space<vmem>>) attributes {dimension_semantics = [#tpu.dimension_semantics<parallel>], iteration_bounds = array<i64: 1>, scalar_prefetch = 0 : i64, scratch_operands = 0 : i64, tpu.core_type = #tpu.core_type<tc>, window_params = [{transform_indices = @transform_0, window_bounds = array<i64: 28, 256>}, {pipeline_mode = #tpu.pipeline_mode<synchronous>, transform_indices = @transform_1, window_bounds = array<i64: 32, 28>}, {pipeline_mode = #tpu.pipeline_mode<synchronous>, transform_indices = @transform_2, window_bounds = array<i64: 32, 1>}, {pipeline_mode = #tpu.pipeline_mode<synchronous>, transform_indices = @transform_3, window_bounds = array<i64: 32, 32>}, {pipeline_mode = #tpu.pipeline_mode<synchronous>, transform_indices = @transform_4, window_bounds = array<i64: 32, 1>}, {pipeline_mode = #tpu.pipeline_mode<synchronous>, transform_indices = @transform_5, window_bounds = array<i64: 3, 32>}, {pipeline_mode = #tpu.pipeline_mode<synchronous>, transform_indices = @transform_6, window_bounds = array<i64: 3, 1>}, {transform_indices = @transform_7, window_bounds = array<i64: 3, 256>}, {transform_indices = @transform_8, window_bounds = array<i64: 1, 256>}]} {
    %c0 = arith.constant 0 : index
    %c0_0 = arith.constant 0 : index
    %0 = vector.load %arg1[%c0, %c0_0] : memref<28x256xf32, #tpu.memory_space<vmem>>, vector<28x256xf32>
    %c0_1 = arith.constant 0 : index
    %c0_2 = arith.constant 0 : index
    %1 = vector.load %arg2[%c0_1, %c0_2] : memref<32x28xf32, #tpu.memory_space<vmem>>, vector<32x28xf32>
    %cst = arith.constant dense<0.000000e+00> : vector<32x256xf32>
    %2 = tpu.matmul %1, %0, %cst {dimension_numbers = #tpu.dot_dimension_numbers<[1], [0], [0], [1], [0, 0, 1, 1], [], []>} : vector<32x28xf32>, vector<28x256xf32>, vector<32x256xf32> -> vector<32x256xf32>
    %c0_3 = arith.constant 0 : index
    %c0_4 = arith.constant 0 : index
    %3 = vector.load %arg3[%c0_3, %c0_4] : memref<32x1xf32, #tpu.memory_space<vmem>>, vector<32x1xf32>
    %4 = vector.broadcast %3 : vector<32x1xf32> to vector<32x256xf32>
    %5 = arith.addf %2, %4 : vector<32x256xf32>
    %cst_5 = arith.constant 0.000000e+00 : f32
    %6 = vector.broadcast %cst_5 : f32 to vector<32x256xf32>
    %7 = arith.maximumf %5, %6 : vector<32x256xf32>
    %c0_6 = arith.constant 0 : index
    %c0_7 = arith.constant 0 : index
    %8 = vector.load %arg4[%c0_6, %c0_7] : memref<32x32xf32, #tpu.memory_space<vmem>>, vector<32x32xf32>
    %cst_8 = arith.constant dense<0.000000e+00> : vector<32x256xf32>
    %9 = tpu.matmul %8, %7, %cst_8 {dimension_numbers = #tpu.dot_dimension_numbers<[1], [0], [0], [1], [0, 0, 1, 1], [], []>} : vector<32x32xf32>, vector<32x256xf32>, vector<32x256xf32> -> vector<32x256xf32>
    %c0_9 = arith.constant 0 : index
    %c0_10 = arith.constant 0 : index
    %10 = vector.load %arg5[%c0_9, %c0_10] : memref<32x1xf32, #tpu.memory_space<vmem>>, vector<32x1xf32>
    %11 = vector.broadcast %10 : vector<32x1xf32> to vector<32x256xf32>
    %12 = arith.addf %9, %11 : vector<32x256xf32>
    %cst_11 = arith.constant 0.000000e+00 : f32
    %13 = vector.broadcast %cst_11 : f32 to vector<32x256xf32>
    %14 = arith.maximumf %12, %13 : vector<32x256xf32>
    %c0_12 = arith.constant 0 : index
    %c0_13 = arith.constant 0 : index
    %15 = vector.load %arg6[%c0_12, %c0_13] : memref<3x32xf32, #tpu.memory_space<vmem>>, vector<3x32xf32>
    %cst_14 = arith.constant dense<0.000000e+00> : vector<3x256xf32>
    %16 = tpu.matmul %15, %14, %cst_14 {dimension_numbers = #tpu.dot_dimension_numbers<[1], [0], [0], [1], [0, 0, 1, 1], [], []>} : vector<3x32xf32>, vector<32x256xf32>, vector<3x256xf32> -> vector<3x256xf32>
    %c0_15 = arith.constant 0 : index
    %c0_16 = arith.constant 0 : index
    %17 = vector.load %arg7[%c0_15, %c0_16] : memref<3x1xf32, #tpu.memory_space<vmem>>, vector<3x1xf32>
    %18 = vector.broadcast %17 : vector<3x1xf32> to vector<3x256xf32>
    %19 = arith.addf %16, %18 : vector<3x256xf32>
    %20 = math.tanh %19 : vector<3x256xf32>
    %cst_17 = arith.constant 5.000000e-02 : f32
    %21 = vector.broadcast %cst_17 : f32 to vector<3x256xf32>
    %22 = arith.mulf %20, %21 : vector<3x256xf32>
    %c0_18 = arith.constant 0 : index
    %c0_19 = arith.constant 0 : index
    %23 = vector.load %arg8[%c0_18, %c0_19] : memref<3x256xf32, #tpu.memory_space<vmem>>, vector<3x256xf32>
    tpu.vector_store %arg8[%c0_18, %c0_19], %22 {strides = array<i32>} : memref<3x256xf32, #tpu.memory_space<vmem>>, vector<3x256xf32>,
    %24 = arith.mulf %22, %22 : vector<3x256xf32>
    %cst_20 = arith.constant dense<0.000000e+00> : vector<256xf32>
    %25 = vector.multi_reduction <add>, %24, %cst_20 [0] : vector<3x256xf32> to vector<256xf32>
    %26 = vector.shape_cast %25 : vector<256xf32> to vector<1x256xf32>
    %27 = math.sqrt %26 : vector<1x256xf32>
    %28 = tpu.iota {dimensions = array<i32: 1>} : vector<1x256xi32>
    %c256_i32 = arith.constant 256 : i32
    %29 = arith.muli %arg0, %c256_i32 : i32
    %30 = vector.broadcast %29 : i32 to vector<1x256xi32>
    %31 = arith.addi %28, %30 : vector<1x256xi32>
    %c256_i32_21 = arith.constant 256 : i32
    %32 = vector.broadcast %c256_i32_21 : i32 to vector<1x256xi32>
    %33 = arith.cmpi slt, %31, %32 : vector<1x256xi32>
    %cst_22 = arith.constant 0.000000e+00 : f32
    %34 = vector.broadcast %cst_22 : f32 to vector<1x256xf32>
    %35 = arith.select %33, %27, %34 : vector<1x256xi1>, vector<1x256xf32>
    %c0_23 = arith.constant 0 : index
    %c0_24 = arith.constant 0 : index
    %36 = vector.load %arg9[%c0_23, %c0_24] : memref<1x256xf32, #tpu.memory_space<vmem>>, vector<1x256xf32>
    tpu.vector_store %arg9[%c0_23, %c0_24], %35 {strides = array<i32>} : memref<1x256xf32, #tpu.memory_space<vmem>>, vector<1x256xf32>,
    return
  }
  func.func @transform_0(%arg0: i32) -> (i32, i32) {
    %c0_i32 = arith.constant 0 : i32
    %c0_i32_0 = arith.constant 0 : i32
    return %c0_i32, %arg0 : i32, i32
  }
  func.func @transform_1(%arg0: i32) -> (i32, i32) {
    %c0_i32 = arith.constant 0 : i32
    %c0_i32_0 = arith.constant 0 : i32
    %c0_i32_1 = arith.constant 0 : i32
    return %c0_i32, %c0_i32_0 : i32, i32
  }
  func.func @transform_2(%arg0: i32) -> (i32, i32) {
    %c0_i32 = arith.constant 0 : i32
    %c0_i32_0 = arith.constant 0 : i32
    %c0_i32_1 = arith.constant 0 : i32
    return %c0_i32, %c0_i32_0 : i32, i32
  }
  func.func @transform_3(%arg0: i32) -> (i32, i32) {
    %c0_i32 = arith.constant 0 : i32
    %c0_i32_0 = arith.constant 0 : i32
    %c0_i32_1 = arith.constant 0 : i32
    return %c0_i32, %c0_i32_0 : i32, i32
  }
  func.func @transform_4(%arg0: i32) -> (i32, i32) {
    %c0_i32 = arith.constant 0 : i32
    %c0_i32_0 = arith.constant 0 : i32
    %c0_i32_1 = arith.constant 0 : i32
    return %c0_i32, %c0_i32_0 : i32, i32
  }
  func.func @transform_5(%arg0: i32) -> (i32, i32) {
    %c0_i32 = arith.constant 0 : i32
    %c0_i32_0 = arith.constant 0 : i32
    %c0_i32_1 = arith.constant 0 : i32
    return %c0_i32, %c0_i32_0 : i32, i32
  }
  func.func @transform_6(%arg0: i32) -> (i32, i32) {
    %c0_i32 = arith.constant 0 : i32
    %c0_i32_0 = arith.constant 0 : i32
    %c0_i32_1 = arith.constant 0 : i32
    return %c0_i32, %c0_i32_0 : i32, i32
  }
  func.func @transform_7(%arg0: i32) -> (i32, i32) {
    %c0_i32 = arith.constant 0 : i32
    %c0_i32_0 = arith.constant 0 : i32
    return %c0_i32, %arg0 : i32, i32
  }
  func.func @transform_8(%arg0: i32) -> (i32, i32) {
    %c0_i32 = arith.constant 0 : i32
    %c0_i32_0 = arith.constant 0 : i32
    return %c0_i32, %arg0 : i32, i32
  }
}

</mosaic_0001>

<llo_original>
// kernel: tpu_custom_call.1
$region0: #{tpu_custom_call.1}
  #allocation0 [shape = 'u32[]', space=smem, size = 0x4, offset = 0x4, fixed_abs, tag = 'smem constant byte address 0x4 - core index']
  #allocation1 [shape = 'u32[144,128]{1,0:T(1,128)}', space=vmem, size = 0x12000, scoped, tag = 'internal scratch']
  %s0 = inlined_call_operand.vmem [shape: f32[28,256], index: 0, kind: input, shape index: {}]
  %s1 = inlined_call_operand.hbm [shape: f32[32,28], index: 1, kind: input, shape index: {}]
  %s2 = inlined_call_operand.vmem [shape: f32[32,1], index: 2, kind: input, shape index: {}]
  %s3 = inlined_call_operand.hbm [shape: f32[32,32], index: 3, kind: input, shape index: {}]
  %s4 = inlined_call_operand.vmem [shape: f32[32,1], index: 4, kind: input, shape index: {}]
  %s5 = inlined_call_operand.vmem [shape: f32[3,32], index: 5, kind: input, shape index: {}]
  %s6 = inlined_call_operand.vmem [shape: f32[3,1], index: 6, kind: input, shape index: {}]
  %s7 = inlined_call_operand.hbm [shape: f32[3,256], index: 7, kind: output, shape index: {0}]
  %s8 = inlined_call_operand.hbm [shape: f32[1,256], index: 8, kind: output, shape index: {1}]
  %9 = xla_tuple %s7, %s8
  %s10 = sld [smem:[#allocation0]]
  $region54: #{tpu_custom_call.1} parent=0
    _
  %s12 = ssub.s32 1, %s10
  %s13 = scalar_select 0, %s12, %s10
  $region1: #{tpu_custom_call.1} parent=0
    #allocation2 [shape = 'u8[16384]{0}', space=vmem, size = 0x4000, scoped, tag = 'input window, operand 1, single buffered']
    #allocation3 [shape = 's32[1]{0}', space=sflag, size = 0x4, scoped, tag = 'scoped memory for tpu_custom_call.1']
    #allocation4 [shape = 's32[1]{0}', space=sflag, size = 0x4, scoped, tag = 'scoped memory for tpu_custom_call.1']
    #allocation5 [shape = 'u8[16384]{0}', space=vmem, size = 0x4000, scoped, tag = 'input window, operand 3, single buffered']
    #allocation6 [shape = 's32[1]{0}', space=sflag, size = 0x4, scoped, tag = 'scoped memory for tpu_custom_call.1']
    #allocation7 [shape = 'u8[4096]{0}', space=vmem, size = 0x1000, scoped, tag = 'output window, operand 0, single buffered']
    #allocation8 [shape = 'u8[1024]{0}', space=vmem, size = 0x400, scoped, tag = 'output window, operand 1, single buffered']
    #allocation9 [shape = 's32[1]{0}', space=sflag, size = 0x4, scoped, tag = 'scoped memory for tpu_custom_call.1']
    %14 = vsyncpa [#allocation3], 0
    %15 = vsyncpa [#allocation6], 0
    %16 = vsyncpa [#allocation4], 0
    %17 = vsyncpa [#allocation9], 0
    // Predicated region
    $region2: #{tpu_custom_call.1} parent=1 // pred_check
      _
    $region3: #{tpu_custom_call.1} parent=1 // pred_check_branch
      %19 = sbr.rel (0) target = $region5
    $region4: #{tpu_custom_call.1} parent=1 // pred_region
      _
    $region5: #{tpu_custom_call.1} parent=1 // pred_fallthru
      _
    // Predicated region
    $region6: #{tpu_custom_call.1} parent=1 // pred_check
      _
    $region7: #{tpu_custom_call.1} parent=1 // pred_check_branch
      %21 = sbr.rel (0) target = $region9
    $region8: #{tpu_custom_call.1} parent=1 // pred_region
      %s23 = ssub.s32 512, 512
      %24 = vsyncadd [#allocation3], %s23
      %s25 = sshll.u32 [#allocation2], 4
      %s26 = int_to_ptr.vmem [resolvable:$true] %s25
      %31 = dma.hbm_to_vmem [thread:$0]  %s1, 512, %s26, [#allocation3], 128, 128, 8
    $region9: #{tpu_custom_call.1} parent=1 // pred_fallthru
      _
    // Predicated region
    $region10: #{tpu_custom_call.1} parent=1 // pred_check
      _
    $region11: #{tpu_custom_call.1} parent=1 // pred_check_branch
      %33 = sbr.rel (0) target = $region13
    $region12: #{tpu_custom_call.1} parent=1 // pred_region
      _
    $region13: #{tpu_custom_call.1} parent=1 // pred_fallthru
      _
    // Predicated region
    $region14: #{tpu_custom_call.1} parent=1 // pred_check
      _
    $region15: #{tpu_custom_call.1} parent=1 // pred_check_branch
      %35 = sbr.rel (0) target = $region17
    $region16: #{tpu_custom_call.1} parent=1 // pred_region
      %s37 = ssub.s32 512, 512
      %38 = vsyncadd [#allocation6], %s37
      %s39 = sshll.u32 [#allocation5], 4
      %s40 = int_to_ptr.vmem [resolvable:$true] %s39
      %45 = dma.hbm_to_vmem [thread:$0]  %s3, 512, %s40, [#allocation6], 128, 128, 8
    $region17: #{tpu_custom_call.1} parent=1 // pred_fallthru
      _
    // Predicated region
    $region18: #{tpu_custom_call.1} parent=1 // pred_check
      _
    $region19: #{tpu_custom_call.1} parent=1 // pred_check_branch
      %47 = sbr.rel (0) target = $region21
    $region20: #{tpu_custom_call.1} parent=1 // pred_region
      _
    $region21: #{tpu_custom_call.1} parent=1 // pred_fallthru
      _
    // Predicated region
    $region22: #{tpu_custom_call.1} parent=1 // pred_check
      _
    $region23: #{tpu_custom_call.1} parent=1 // pred_check_branch
      %49 = sbr.rel (0) target = $region25
    $region24: #{tpu_custom_call.1} parent=1 // pred_region
      _
    $region25: #{tpu_custom_call.1} parent=1 // pred_fallthru
      _
    // Predicated region
    $region26: #{tpu_custom_call.1} parent=1 // pred_check
      _
    $region27: #{tpu_custom_call.1} parent=1 // pred_check_branch
      %51 = sbr.rel (0) target = $region29
    $region28: #{tpu_custom_call.1} parent=1 // pred_region
      _
    $region29: #{tpu_custom_call.1} parent=1 // pred_fallthru
      _
    // Predicated region
    $region30: #{tpu_custom_call.1} parent=1 // pred_check
      _
    $region31: #{tpu_custom_call.1} parent=1 // pred_check_branch
      %53 = sbr.rel (0) target = $region33
    $region32: #{tpu_custom_call.1} parent=1 // pred_region
      %54 = dma.done [#allocation3], 512
    $region33: #{tpu_custom_call.1} parent=1 // pred_fallthru
      _
    // Predicated region
    $region34: #{tpu_custom_call.1} parent=1 // pred_check
      _
    $region35: #{tpu_custom_call.1} parent=1 // pred_check_branch
      %56 = sbr.rel (0) target = $region37
    $region36: #{tpu_custom_call.1} parent=1 // pred_region
      %57 = dma.done [#allocation6], 512
    $region37: #{tpu_custom_call.1} parent=1 // pred_fallthru
      _
    %v58 = vld [vmem:[%s0] sm:$0xff]
    %v59 = vld [vmem:[%s0 + $0x8] sm:$0xff]
    %v60 = vld [vmem:[%s0 + $0x10] sm:$0xff]
    %v61 = vld [vmem:[%s0 + $0x18] sm:$0xff]
    %v62 = vld [vmem:[%s0 + $0x20] sm:$0xff]
    %v63 = vld [vmem:[%s0 + $0x28] sm:$0xff]
    %v64 = vld [vmem:[%s0 + $0x30] sm:$0xf]
    %v65 = vld [vmem:[%s0 + $0x38] sm:$0xf]
    %v66 = vld [vmem:[#allocation2] sm:$0xff]
    %v67 = vld [vmem:[#allocation2 + $0x8] sm:$0xff]
    %v68 = vld [vmem:[#allocation2 + $0x10] sm:$0xff]
    %v69 = vld [vmem:[#allocation2 + $0x18] sm:$0xff]
    %v70 = vld [vmem:[%s2] sm:$0xff]
    %v71 = vld [vmem:[%s2 + $0x8] sm:$0xff]
    %v72 = vld [vmem:[%s2 + $0x10] sm:$0xff]
    %v73 = vld [vmem:[%s2 + $0x18] sm:$0xff]
    %75 = vset.pattern.permute.xlu0 0
    %76 = vperm.xlu0 %75, %v70
    %v77 = vpop.permute.xlu0 %76
    %80 = vset.pattern.permute.xlu0 0
    %81 = vperm.xlu0 %80, %v71
    %v82 = vpop.permute.xlu0 %81
    %85 = vset.pattern.permute.xlu0 0
    %86 = vperm.xlu0 %85, %v72
    %v87 = vpop.permute.xlu0 %86
    %90 = vset.pattern.permute.xlu0 0
    %91 = vperm.xlu0 %90, %v73
    %v92 = vpop.permute.xlu0 %91
    %vm94 = vcmask 228352
    %v96 = vsel %vm94, %v66, 0
    %v99 = vsel %vm94, %v67, 0
    %v102 = vsel %vm94, %v68, 0
    %v105 = vsel %vm94, %v69, 0
    %vm107 = vcmask 1043456
    %v109 = vsel %vm107, %v64, 0
    %v112 = vsel %vm107, %v65, 0
    %114 = vmatprep.subr.mxu0 0.0
    %115 = vmatpush1.msra.mxu0 0.0
    %116 = vmatprep.subr.mxu0 0.0
    %117 = vmatpush1.msra.mxu0 0.0
    %118 = vmatprep.subr.mxu0 0.0
    %119 = vmatpush1.msra.mxu0 0.0
    %120 = vmatprep.subr.mxu0 0.0
    %121 = vmatpush1.msra.mxu0 0.0
    %122 = vmatprep.subr.mxu0 0.0
    %123 = vmatpush1.msra.mxu0 0.0
    %124 = vmatprep.subr.mxu0 0.0
    %125 = vmatpush1.msra.mxu0 0.0
    %126 = vmatprep.subr.mxu0 0.0
    %127 = vmatpush1.msra.mxu0 0.0
    %128 = vmatprep.subr.mxu0 0.0
    %129 = vmatpush1.msra.mxu0 0.0
    %130 = vmatprep.subr.mxu0 0.0
    %131 = vmatpush1.msra.mxu0 0.0
    %132 = vmatprep.subr.mxu0 0.0
    %133 = vmatpush1.msra.mxu0 0.0
    %134 = vmatprep.subr.mxu0 0.0
    %135 = vmatpush1.msra.mxu0 0.0
    %136 = vmatprep.subr.mxu0 0.0
    %137 = vmatpush1.msra.mxu0 0.0
    %138 = vmatprep.subr.mxu0 %v112
    %139 = vmatpush1.msra.mxu0 %v109
    %140 = vmatprep.subr.mxu0 %v63
    %141 = vmatpush1.msra.mxu0 %v62
    %142 = vmatprep.subr.mxu0 %v61
    %143 = vmatpush1.msra.mxu0 %v60
    %144 = vmatprep.subr.mxu0 %v59
    %145 = vmatpush1.msra.mxu0 %v58
    %146 = vmatprep.subr.mxu0 0.0
    %147 = vmatpush2.msra.mxu0 0.0
    %148 = vmatprep.subr.mxu0 0.0
    %149 = vmatpush2.msra.mxu0 0.0
    %150 = vmatprep.subr.mxu0 0.0
    %151 = vmatpush2.msra.mxu0 0.0
    %152 = vmatprep.subr.mxu0 0.0
    %153 = vmatpush2.msra.mxu0 0.0
    %154 = vmatprep.subr.mxu0 0.0
    %155 = vmatpush2.msra.mxu0 0.0
    %156 = vmatprep.subr.mxu0 0.0
    %157 = vmatpush2.msra.mxu0 0.0
    %158 = vmatprep.subr.mxu0 0.0
    %159 = vmatpush2.msra.mxu0 0.0
    %160 = vmatprep.subr.mxu0 0.0
    %161 = vmatpush2.msra.mxu0 0.0
    %162 = vmatprep.subr.mxu0 0.0
    %163 = vmatpush2.msra.mxu0 0.0
    %164 = vmatprep.subr.mxu0 0.0
    %165 = vmatpush2.msra.mxu0 0.0
    %166 = vmatprep.subr.mxu0 0.0
    %167 = vmatpush2.msra.mxu0 0.0
    %168 = vmatprep.subr.mxu0 0.0
    %169 = vmatpush2.msra.mxu0 0.0
    %170 = vmatprep.subr.mxu0 0.0
    %171 = vmatpush2.msra.mxu0 0.0
    %172 = vmatprep.subr.mxu0 0.0
    %173 = vmatpush2.msra.mxu0 0.0
    %174 = vmatprep.subr.mxu0 0.0
    %175 = vmatpush2.msra.mxu0 0.0
    %176 = vmatprep.subr.mxu0 0.0
    %177 = vmatpush2.msra.mxu0 0.0
    %178 = vmatprep.mubr.f32.mxu0 0.0
    %179 = vmatmul.mubr.f32.gmra.mxu0 %v96
    %v180 = vpop.f32.mrf.mxu0
    %v181 = vadd.f32 %v77, %v180
    %v182 = vpop.f32.mrf.mxu0
    %v183 = vadd.f32 %v77, %v182
    %184 = vmatprep.mubr.f32.mxu0 0.0
    %185 = vmatmul.mubr.f32.gmra.mxu0 %v99
    %v186 = vpop.f32.mrf.mxu0
    %v187 = vadd.f32 %v82, %v186
    %v188 = vpop.f32.mrf.mxu0
    %v189 = vadd.f32 %v82, %v188
    %190 = vmatprep.mubr.f32.mxu0 0.0
    %191 = vmatmul.mubr.f32.gmra.mxu0 %v102
    %v192 = vpop.f32.mrf.mxu0
    %v193 = vadd.f32 %v87, %v192
    %v194 = vpop.f32.mrf.mxu0
    %v195 = vadd.f32 %v87, %v194
    %196 = vmatprep.mubr.f32.mxu0 0.0
    %197 = vmatmul.mubr.f32.gmra.mxu0 %v105
    %v198 = vpop.f32.mrf.mxu0
    %v199 = vadd.f32 %v92, %v198
    %v200 = vpop.f32.mrf.mxu0
    %v201 = vadd.f32 %v92, %v200
    %202 = vdwg.mxu0
    %v203 = vmax.f32 %v181, 0.0
    %v204 = vmax.f32 %v183, 0.0
    %v205 = vmax.f32 %v187, 0.0
    %v206 = vmax.f32 %v189, 0.0
    %v207 = vmax.f32 %v193, 0.0
    %v208 = vmax.f32 %v195, 0.0
    %v209 = vmax.f32 %v199, 0.0
    %v210 = vmax.f32 %v201, 0.0
    %v211 = vld [vmem:[#allocation5] sm:$0xff]
    %v212 = vld [vmem:[#allocation5 + $0x8] sm:$0xff]
    %v213 = vld [vmem:[#allocation5 + $0x10] sm:$0xff]
    %v214 = vld [vmem:[#allocation5 + $0x18] sm:$0xff]
    %v215 = vld [vmem:[%s4] sm:$0xff]
    %v216 = vld [vmem:[%s4 + $0x8] sm:$0xff]
    %v217 = vld [vmem:[%s4 + $0x10] sm:$0xff]
    %v218 = vld [vmem:[%s4 + $0x18] sm:$0xff]
    %220 = vset.pattern.permute.xlu0 0
    %221 = vperm.xlu0 %220, %v215
    %v222 = vpop.permute.xlu0 %221
    %225 = vset.pattern.permute.xlu0 0
    %226 = vperm.xlu0 %225, %v216
    %v227 = vpop.permute.xlu0 %226
    %230 = vset.pattern.permute.xlu0 0
    %231 = vperm.xlu0 %230, %v217
    %v232 = vpop.permute.xlu0 %231
    %235 = vset.pattern.permute.xlu0 0
    %236 = vperm.xlu0 %235, %v218
    %v237 = vpop.permute.xlu0 %236
    %vm239 = vcmask 261120
    %v241 = vsel %vm239, %v211, 0
    %v244 = vsel %vm239, %v212, 0
    %v247 = vsel %vm239, %v213, 0
    %v250 = vsel %vm239, %v214, 0
    %252 = vmatprep.subr.mxu0 0.0
    %253 = vmatpush1.msra.mxu0 0.0
    %254 = vmatprep.subr.mxu0 0.0
    %255 = vmatpush1.msra.mxu0 0.0
    %256 = vmatprep.subr.mxu0 0.0
    %257 = vmatpush1.msra.mxu0 0.0
    %258 = vmatprep.subr.mxu0 0.0
    %259 = vmatpush1.msra.mxu0 0.0
    %260 = vmatprep.subr.mxu0 0.0
    %261 = vmatpush1.msra.mxu0 0.0
    %262 = vmatprep.subr.mxu0 0.0
    %263 = vmatpush1.msra.mxu0 0.0
    %264 = vmatprep.subr.mxu0 0.0
    %265 = vmatpush1.msra.mxu0 0.0
    %266 = vmatprep.subr.mxu0 0.0
    %267 = vmatpush1.msra.mxu0 0.0
    %268 = vmatprep.subr.mxu0 0.0
    %269 = vmatpush1.msra.mxu0 0.0
    %270 = vmatprep.subr.mxu0 0.0
    %271 = vmatpush1.msra.mxu0 0.0
    %272 = vmatprep.subr.mxu0 0.0
    %273 = vmatpush1.msra.mxu0 0.0
    %274 = vmatprep.subr.mxu0 0.0
    %275 = vmatpush1.msra.mxu0 0.0
    %276 = vmatprep.subr.mxu0 %v210
    %277 = vmatpush1.msra.mxu0 %v209
    %278 = vmatprep.subr.mxu0 %v208
    %279 = vmatpush1.msra.mxu0 %v207
    %280 = vmatprep.subr.mxu0 %v206
    %281 = vmatpush1.msra.mxu0 %v205
    %282 = vmatprep.subr.mxu0 %v204
    %283 = vmatpush1.msra.mxu0 %v203
    %284 = vmatprep.subr.mxu0 0.0
    %285 = vmatpush2.msra.mxu0 0.0
    %286 = vmatprep.subr.mxu0 0.0
    %287 = vmatpush2.msra.mxu0 0.0
    %288 = vmatprep.subr.mxu0 0.0
    %289 = vmatpush2.msra.mxu0 0.0
    %290 = vmatprep.subr.mxu0 0.0
    %291 = vmatpush2.msra.mxu0 0.0
    %292 = vmatprep.subr.mxu0 0.0
    %293 = vmatpush2.msra.mxu0 0.0
    %294 = vmatprep.subr.mxu0 0.0
    %295 = vmatpush2.msra.mxu0 0.0
    %296 = vmatprep.subr.mxu0 0.0
    %297 = vmatpush2.msra.mxu0 0.0
    %298 = vmatprep.subr.mxu0 0.0
    %299 = vmatpush2.msra.mxu0 0.0
    %300 = vmatprep.subr.mxu0 0.0
    %301 = vmatpush2.msra.mxu0 0.0
    %302 = vmatprep.subr.mxu0 0.0
    %303 = vmatpush2.msra.mxu0 0.0
    %304 = vmatprep.subr.mxu0 0.0
    %305 = vmatpush2.msra.mxu0 0.0
    %306 = vmatprep.subr.mxu0 0.0
    %307 = vmatpush2.msra.mxu0 0.0
    %308 = vmatprep.subr.mxu0 0.0
    %309 = vmatpush2.msra.mxu0 0.0
    %310 = vmatprep.subr.mxu0 0.0
    %311 = vmatpush2.msra.mxu0 0.0
    %312 = vmatprep.subr.mxu0 0.0
    %313 = vmatpush2.msra.mxu0 0.0
    %314 = vmatprep.subr.mxu0 0.0
    %315 = vmatpush2.msra.mxu0 0.0
    %316 = vmatprep.mubr.f32.mxu0 0.0
    %317 = vmatmul.mubr.f32.gmra.mxu0 %v241
    %v318 = vpop.f32.mrf.mxu0
    %v319 = vadd.f32 %v222, %v318
    %v320 = vpop.f32.mrf.mxu0
    %v321 = vadd.f32 %v222, %v320
    %322 = vmatprep.mubr.f32.mxu0 0.0
    %323 = vmatmul.mubr.f32.gmra.mxu0 %v244
    %v324 = vpop.f32.mrf.mxu0
    %v325 = vadd.f32 %v227, %v324
    %v326 = vpop.f32.mrf.mxu0
    %v327 = vadd.f32 %v227, %v326
    %328 = vmatprep.mubr.f32.mxu0 0.0
    %329 = vmatmul.mubr.f32.gmra.mxu0 %v247
    %v330 = vpop.f32.mrf.mxu0
    %v331 = vadd.f32 %v232, %v330
    %v332 = vpop.f32.mrf.mxu0
    %v333 = vadd.f32 %v232, %v332
    %334 = vmatprep.mubr.f32.mxu0 0.0
    %335 = vmatmul.mubr.f32.gmra.mxu0 %v250
    %v336 = vpop.f32.mrf.mxu0
    %v337 = vadd.f32 %v237, %v336
    %v338 = vpop.f32.mrf.mxu0
    %v339 = vadd.f32 %v237, %v338
    %340 = vdwg.mxu0
    %v341 = vmax.f32 %v319, 0.0
    %v342 = vmax.f32 %v321, 0.0
    %v343 = vmax.f32 %v325, 0.0
    %v344 = vmax.f32 %v327, 0.0
    %v345 = vmax.f32 %v331, 0.0
    %v346 = vmax.f32 %v333, 0.0
    %v347 = vmax.f32 %v337, 0.0
    %v348 = vmax.f32 %v339, 0.0
    %v349 = vld [vmem:[%s5] sm:$0x7]
    %v350 = vld [vmem:[%s6] sm:$0x7]
    %352 = vset.pattern.permute.xlu0 0
    %353 = vperm.xlu0 %352, %v350
    %v354 = vpop.permute.xlu0 %353
    %v357 = vsel %vm239, %v349, 0
    %359 = vmatprep.subr.mxu0 0.0
    %360 = vmatpush1.msra.mxu0 0.0
    %361 = vmatprep.subr.mxu0 0.0
    %362 = vmatpush1.msra.mxu0 0.0
    %363 = vmatprep.subr.mxu0 0.0
    %364 = vmatpush1.msra.mxu0 0.0
    %365 = vmatprep.subr.mxu0 0.0
    %366 = vmatpush1.msra.mxu0 0.0
    %367 = vmatprep.subr.mxu0 0.0
    %368 = vmatpush1.msra.mxu0 0.0
    %369 = vmatprep.subr.mxu0 0.0
    %370 = vmatpush1.msra.mxu0 0.0
    %371 = vmatprep.subr.mxu0 0.0
    %372 = vmatpush1.msra.mxu0 0.0
    %373 = vmatprep.subr.mxu0 0.0
    %374 = vmatpush1.msra.mxu0 0.0
    %375 = vmatprep.subr.mxu0 0.0
    %376 = vmatpush1.msra.mxu0 0.0
    %377 = vmatprep.subr.mxu0 0.0
    %378 = vmatpush1.msra.mxu0 0.0
    %379 = vmatprep.subr.mxu0 0.0
    %380 = vmatpush1.msra.mxu0 0.0
    %381 = vmatprep.subr.mxu0 0.0
    %382 = vmatpush1.msra.mxu0 0.0
    %383 = vmatprep.subr.mxu0 %v348
    %384 = vmatpush1.msra.mxu0 %v347
    %385 = vmatprep.subr.mxu0 %v346
    %386 = vmatpush1.msra.mxu0 %v345
    %387 = vmatprep.subr.mxu0 %v344
    %388 = vmatpush1.msra.mxu0 %v343
    %389 = vmatprep.subr.mxu0 %v342
    %390 = vmatpush1.msra.mxu0 %v341
    %391 = vmatprep.subr.mxu0 0.0
    %392 = vmatpush2.msra.mxu0 0.0
    %393 = vmatprep.subr.mxu0 0.0
    %394 = vmatpush2.msra.mxu0 0.0
    %395 = vmatprep.subr.mxu0 0.0
    %396 = vmatpush2.msra.mxu0 0.0
    %397 = vmatprep.subr.mxu0 0.0
    %398 = vmatpush2.msra.mxu0 0.0
    %399 = vmatprep.subr.mxu0 0.0
    %400 = vmatpush2.msra.mxu0 0.0
    %401 = vmatprep.subr.mxu0 0.0
    %402 = vmatpush2.msra.mxu0 0.0
    %403 = vmatprep.subr.mxu0 0.0
    %404 = vmatpush2.msra.mxu0 0.0
    %405 = vmatprep.subr.mxu0 0.0
    %406 = vmatpush2.msra.mxu0 0.0
    %407 = vmatprep.subr.mxu0 0.0
    %408 = vmatpush2.msra.mxu0 0.0
    %409 = vmatprep.subr.mxu0 0.0
    %410 = vmatpush2.msra.mxu0 0.0
    %411 = vmatprep.subr.mxu0 0.0
    %412 = vmatpush2.msra.mxu0 0.0
    %413 = vmatprep.subr.mxu0 0.0
    %414 = vmatpush2.msra.mxu0 0.0
    %415 = vmatprep.subr.mxu0 0.0
    %416 = vmatpush2.msra.mxu0 0.0
    %417 = vmatprep.subr.mxu0 0.0
    %418 = vmatpush2.msra.mxu0 0.0
    %419 = vmatprep.subr.mxu0 0.0
    %420 = vmatpush2.msra.mxu0 0.0
    %421 = vmatprep.subr.mxu0 0.0
    %422 = vmatpush2.msra.mxu0 0.0
    %423 = vmatprep.mubr.f32.mxu0 0.0
    %424 = vmatmul.mubr.f32.gmra.mxu0 %v357
    %v425 = vpop.f32.mrf.mxu0
    %v426 = vadd.f32 %v354, %v425
    %v427 = vpop.f32.mrf.mxu0
    %v428 = vadd.f32 %v354, %v427
    %429 = vdwg.mxu0
    %v430 = vtanh.pop %v426
    %v431 = vtanh.pop %v428
    %v432 = vmul.f32 %v430, 0.05
    %v433 = vmul.f32 %v431, 0.05
    %v436 = vcombine.low %v432, %v433
    %438 = vst [vmem:[#allocation7] sm:$0x77] %v436
    %v439 = vmul.f32 %v432, %v432
    %v440 = vmul.f32 %v433, %v433
    %vm441 = vcmask 1042432
    %v442 = vsel %vm441, %v439, 0.0
    %v443 = vrot.slane %v442, 4
    %v444 = vadd.f32 %v442, %v443
    %v445 = vrot.slane %v444, 2
    %v446 = vadd.f32 %v444, %v445
    %v447 = vrot.slane %v446, 1
    %v448 = vadd.f32 %v446, %v447
    %v449 = vsel %vm441, %v440, 0.0
    %v450 = vrot.slane %v449, 4
    %v451 = vadd.f32 %v449, %v450
    %v452 = vrot.slane %v451, 2
    %v453 = vadd.f32 %v451, %v452
    %v454 = vrot.slane %v453, 1
    %v455 = vadd.f32 %v453, %v454
    %v456 = vrsqrt.pop %v448
    %v457 = vmul.f32 %v448, %v456
    %vm458 = vcmp.eq.f32.partialorder %v448, inf
    %v459 = vsel %vm458, %v448, %v457
    %vm460 = vcmp.eq.f32.partialorder %v448, 0.0
    %v461 = vand.u32 %v448, 2147483648
    %v462 = vsel %vm460, %v461, %v459
    %v463 = vrsqrt.pop %v455
    %v464 = vmul.f32 %v455, %v463
    %vm465 = vcmp.eq.f32.partialorder %v455, inf
    %v466 = vsel %vm465, %v455, %v464
    %vm467 = vcmp.eq.f32.partialorder %v455, 0.0
    %v468 = vand.u32 %v455, 2147483648
    %v469 = vsel %vm467, %v468, %v466
    %v470 = vlaneseq
    %v471 = vand.u32 %v470, 127
    %v472 = vadd.s32 %v471, 128
    %s473 = smul.u32 0, 256
    %v474 = vstv %s473
    %v475 = vadd.s32 %v471, %v474
    %v476 = vadd.s32 %v472, %v474
    %vm477 = vcmp.lt.s32.totalorder %v475, 256
    %vm478 = vcmp.lt.s32.totalorder %v476, 256
    %v479 = vsel %vm477, %v462, 0.0
    %v480 = vsel %vm478, %v469, 0.0
    %v483 = vcombine.low %v479, %v480
    %v485 = vunpack.c.l.s4 1966171168
    %v486 = vunpack.c.0.s8 %v485
    %v487 = vlaneseq
    %v488 = vshrl.u32 %v487, 7
    %v489 = vsub.s32 %v486, %v488
    %v490 = vrot.slane %v483, %v489
    %v492 = vunpack.c.l.s4 1966171168
    %v493 = vunpack.c.0.s8 %v492
    %v494 = vlaneseq
    %v495 = vshrl.u32 %v494, 7
    %v496 = vsub.s32 %v493, %v495
    %v497 = vrot.slane %v490, %v496
    %v499 = vlaneseq
    %vm500 = vcmp.ge.s32.totalorder %v499, 0
    %vm501 = vcmp.lt.s32.totalorder %v499, 256
    %vm502 = vmand %vm500, %vm501
    %503 = vst.msk [vmem:[#allocation8] sm:$0x3] %vm502, %v497
    // Predicated region
    $region38: #{tpu_custom_call.1} parent=1 // pred_check
      _
    $region39: #{tpu_custom_call.1} parent=1 // pred_check_branch
      %505 = sbr.rel (0) target = $region41
    $region40: #{tpu_custom_call.1} parent=1 // pred_region
      %s507 = ssub.s32 128, 128
      %508 = vsyncadd [#allocation4], %s507
      %s510 = sshll.u32 [#allocation7], 4
      %s511 = int_to_ptr.vmem [resolvable:$true] %s510
      %513 = dma.vmem_to_hbm [thread:$0]  %s511, 128, %s7, [#allocation4]
    $region41: #{tpu_custom_call.1} parent=1 // pred_fallthru
      _
    // Predicated region
    $region42: #{tpu_custom_call.1} parent=1 // pred_check
      _
    $region43: #{tpu_custom_call.1} parent=1 // pred_check_branch
      %515 = sbr.rel (0) target = $region45
    $region44: #{tpu_custom_call.1} parent=1 // pred_region
      %s517 = ssub.s32 32, 32
      %518 = vsyncadd [#allocation9], %s517
      %s520 = sshll.u32 [#allocation8], 4
      %s521 = int_to_ptr.vmem [resolvable:$true] %s520
      %523 = dma.vmem_to_hbm [thread:$0]  %s521, 32, %s8, [#allocation9]
    $region45: #{tpu_custom_call.1} parent=1 // pred_fallthru
      _
    // Predicated region
    $region46: #{tpu_custom_call.1} parent=1 // pred_check
      _
    $region47: #{tpu_custom_call.1} parent=1 // pred_check_branch
      %525 = sbr.rel (0) target = $region49
    $region48: #{tpu_custom_call.1} parent=1 // pred_region
      %526 = dma.done [#allocation4], 128
    $region49: #{tpu_custom_call.1} parent=1 // pred_fallthru
      _
    // Predicated region
    $region50: #{tpu_custom_call.1} parent=1 // pred_check
      _
    $region51: #{tpu_custom_call.1} parent=1 // pred_check_branch
      %528 = sbr.rel (0) target = $region53
    $region52: #{tpu_custom_call.1} parent=1 // pred_region
      %529 = dma.done [#allocation9], 32
    $region53: #{tpu_custom_call.1} parent=1 // pred_fallthru
      _
    %530 = vsyncpa [#allocation3], 1
    %531 = vsyncpa [#allocation6], 1
    %532 = vsyncpa [#allocation4], 1
    %533 = vsyncpa [#allocation9], 1

</llo_original>
